<compile_context>
chip_gen: v7x
topology: tpu7x:2x2x1
jax: 0.10.0
libtpu: 0.0.40
codegen_flags: <defaults>
</compile_context>

<pallas_src>
import jax
import jax.numpy as jnp
from jax.experimental import pallas as pl
from jax.experimental.pallas import tpu as pltpu

LANE = 128
SUBLANE = 8


def _round_up(n, m):
    return ((n + m - 1) // m) * m


def _dyn_kernel(x_ref, w1_ref, b1_ref, w2_ref, b2_ref, w3_ref, b3_ref, r_ref, o_ref):
    x = x_ref[...]                                  # (TM, num_inputs) f32
    mm_dtype = w1_ref.dtype
    x_mm = x.astype(mm_dtype)

    # layer 1: Linear + ReLU (bf16 MXU inputs, f32 accumulation, f32 epilogue)
    h = jnp.dot(x_mm, w1_ref[...], preferred_element_type=jnp.float32) + b1_ref[...]
    h = jnp.maximum(h, 0.0)

    # layer 2: Linear + ReLU
    h = jnp.dot(h.astype(mm_dtype), w2_ref[...], preferred_element_type=jnp.float32) + b2_ref[...]
    h = jnp.maximum(h, 0.0)

    # output layer + residual fused onto the MXU:
    #   x @ R injects x[:, :num_outputs] into the first lanes of the padded output.
    v = jnp.dot(h.astype(mm_dtype), w3_ref[...], preferred_element_type=jnp.float32)
    v = v + jnp.dot(x_mm, r_ref[...], preferred_element_type=jnp.float32)
    o_ref[...] = (v + b3_ref[...]).astype(o_ref.dtype)


def _pack_params(params, matmul_dtype):
    """Pad hidden/output dims to lane-dense (multiples of 128) and build the
    residual-injection matrix R. Zero padding is exactly semantics-preserving."""
    num_inputs, hidden_dim = params["w1"].shape
    num_outputs = params["w3"].shape[1]
    h_pad = _round_up(hidden_dim, LANE)
    n_pad = _round_up(num_outputs, LANE)

    def pad_to(a, rows, cols):
        return jnp.pad(a, ((0, rows - a.shape[0]), (0, cols - a.shape[1])))

    packed = {
        "w1": pad_to(params["w1"], num_inputs, h_pad).astype(matmul_dtype),
        "b1": pad_to(params["b1"], 1, h_pad).astype(jnp.float32),
        "w2": pad_to(params["w2"], h_pad, h_pad).astype(matmul_dtype),
        "b2": pad_to(params["b2"], 1, h_pad).astype(jnp.float32),
        "w3": pad_to(params["w3"], h_pad, n_pad).astype(matmul_dtype),
        "b3": pad_to(params["b3"], 1, n_pad).astype(jnp.float32),
        # Residual as a matmul (assumes num_outputs <= num_inputs, same as the
        # PyTorch reference's x[:, :v.shape[1]] add).
        "r": pad_to(jnp.eye(num_inputs, num_outputs, dtype=jnp.float32),
                    num_inputs, n_pad).astype(matmul_dtype),
    }
    return packed, num_outputs, n_pad


def deterministic_dynamics_forward(x, params, *, block_rows=1024,
                                   matmul_dtype=jnp.bfloat16):
    """x: (B, num_inputs) float32. params: w1,b1,w2,b2,w3,b3 with weights stored
    transposed as (in, out) and biases as (1, out)."""
    assert block_rows % SUBLANE == 0
    B, num_inputs = x.shape
    x = x.astype(jnp.float32)
    packed, num_outputs, n_pad = _pack_params(params, matmul_dtype)

    # Batch tiling: TM in [8, block_rows], multiple of 8; pad B to a multiple of TM.
    tm = min(block_rows, _round_up(B, SUBLANE))
    b_pad = _round_up(B, tm)
    if b_pad != B:
        x = jnp.pad(x, ((0, b_pad - B), (0, 0)))
    grid = (b_pad // tm,)

    # Weights/biases: full-array blocks, constant index_map -> VMEM-resident.
    resident = lambda a: pl.BlockSpec(a.shape, lambda i: (0, 0))

    out = pl.pallas_call(
        _dyn_kernel,
        out_shape=jax.ShapeDtypeStruct((b_pad, n_pad), jnp.float32),
        grid=grid,
        in_specs=[
            pl.BlockSpec((tm, num_inputs), lambda i: (i, 0)),     # x: pipelined per-tile
            resident(packed["w1"]), resident(packed["b1"]),
            resident(packed["w2"]), resident(packed["b2"]),
            resident(packed["w3"]), resident(packed["b3"]),
            resident(packed["r"]),
        ],
        out_specs=pl.BlockSpec((tm, n_pad), lambda i: (i, 0)),    # lane-dense output slab
        compiler_params=pltpu.CompilerParams(
            # v7x: shard batch tiles across both TensorCores; no-op on v5e/v6e.
            dimension_semantics=("parallel",),
            # Working set (resident weights + double-buffered tiles) is << 32 MiB
            # even at TM=2048, so no explicit vmem_limit_bytes is needed on v7x.
        ),
    )(x, packed["w1"], packed["b1"], packed["w2"], packed["b2"],
      packed["w3"], packed["b3"], packed["r"])

    return out[:B, :num_outputs]


def init_params(key, num_inputs, num_outputs, hidden_dim=64):
    """Mimics nn.Linear's uniform(-1/sqrt(fan_in), 1/sqrt(fan_in)) init.
    Weights stored transposed as (in, out); biases as (1, out)."""
    ks = jax.random.split(key, 6)

    def lin(kw, kb, fan_in, fan_out):
        bound = 1.0 / jnp.sqrt(float(fan_in))
        w = jax.random.uniform(kw, (fan_in, fan_out), jnp.float32, -bound, bound)
        b = jax.random.uniform(kb, (1, fan_out), jnp.float32, -bound, bound)
        return w, b

    w1, b1 = lin(ks[0], ks[1], num_inputs, hidden_dim)
    w2, b2 = lin(ks[2], ks[3], hidden_dim, hidden_dim)
    w3, b3 = lin(ks[4], ks[5], hidden_dim, num_outputs)
    return {"w1": w1, "b1": b1, "w2": w2, "b2": b2, "w3": w3, "b3": b3}


def reference_forward_f32(x, p):
    """Exact f32 semantics of the PyTorch module."""
    h = jnp.maximum(x @ p["w1"] + p["b1"], 0.0)
    h = jnp.maximum(h @ p["w2"] + p["b2"], 0.0)
    v = h @ p["w3"] + p["b3"]
    return v + x[:, : v.shape[1]]


def reference_forward_mirror(x, p, matmul_dtype=jnp.bfloat16):
    """Mirrors the kernel's precision: bf16 matmul inputs, f32 accumulation."""
    c = lambda a: a.astype(matmul_dtype)
    dot = lambda a, b: jnp.dot(c(a), c(b), preferred_element_type=jnp.float32)
    h = jnp.maximum(dot(x, p["w1"]) + p["b1"], 0.0)
    h = jnp.maximum(dot(h, p["w2"]) + p["b2"], 0.0)
    v = dot(h, p["w3"]) + p["b3"]
    return v + c(x)[:, : v.shape[1]].astype(jnp.float32)


if __name__ == "__main__":
    key = jax.random.PRNGKey(0)
    # Small shapes consistent with the module; B deliberately not a multiple of
    # the tile so the padding / multi-step grid path is exercised.
    B, num_inputs, num_outputs, hidden_dim = 20, 16, 12, 64

    k_x, k_p = jax.random.split(key)
    x = jax.random.normal(k_x, (B, num_inputs), jnp.float32)
    params = init_params(k_p, num_inputs, num_outputs, hidden_dim)

    # block_rows=8 here only to get a >1-step grid at toy batch size;
    # the production default is block_rows=1024.
    out = deterministic_dynamics_forward(x, params, block_rows=8)
    out = jax.block_until_ready(out)
    assert out.shape == (B, num_outputs)

    # Tight check against a reference using the same bf16-matmul / f32-accumulate precision.
    ref_mirror = reference_forward_mirror(x, params)
    assert jnp.allclose(out, ref_mirror, atol=5e-3, rtol=5e-3), "mismatch vs precision-mirrored reference"

    # Loose sanity check against the exact f32 module semantics (bf16 accuracy budget).
    ref_f32 = reference_forward_f32(x, params)
    assert jnp.allclose(out, ref_f32, atol=1e-1, rtol=1e-1), "exceeds bf16 accuracy budget vs f32 reference"

    print("KERNEL_OK")
</pallas_src>

<mosaic_0001>
module attributes {stable_mosaic.version = 11 : i64} {
  func.func @_dyn_kernel(%arg0: i32, %arg1: memref<8x16xf32, #tpu.memory_space<vmem>>, %arg2: memref<16x128xbf16, #tpu.memory_space<vmem>>, %arg3: memref<1x128xf32, #tpu.memory_space<vmem>>, %arg4: memref<128x128xbf16, #tpu.memory_space<vmem>>, %arg5: memref<1x128xf32, #tpu.memory_space<vmem>>, %arg6: memref<128x128xbf16, #tpu.memory_space<vmem>>, %arg7: memref<1x128xf32, #tpu.memory_space<vmem>>, %arg8: memref<16x128xbf16, #tpu.memory_space<vmem>>, %arg9: memref<8x128xf32, #tpu.memory_space<vmem>>) attributes {dimension_semantics = [#tpu.dimension_semantics<parallel>], iteration_bounds = array<i64: 3>, scalar_prefetch = 0 : i64, scratch_operands = 0 : i64, tpu.core_type = #tpu.core_type<tc>, window_params = [{transform_indices = @transform_0, window_bounds = array<i64: 8, 16>}, {pipeline_mode = #tpu.pipeline_mode<synchronous>, transform_indices = @transform_1, window_bounds = array<i64: 16, 128>}, {pipeline_mode = #tpu.pipeline_mode<synchronous>, transform_indices = @transform_2, window_bounds = array<i64: 1, 128>}, {pipeline_mode = #tpu.pipeline_mode<synchronous>, transform_indices = @transform_3, window_bounds = array<i64: 128, 128>}, {pipeline_mode = #tpu.pipeline_mode<synchronous>, transform_indices = @transform_4, window_bounds = array<i64: 1, 128>}, {pipeline_mode = #tpu.pipeline_mode<synchronous>, transform_indices = @transform_5, window_bounds = array<i64: 128, 128>}, {pipeline_mode = #tpu.pipeline_mode<synchronous>, transform_indices = @transform_6, window_bounds = array<i64: 1, 128>}, {pipeline_mode = #tpu.pipeline_mode<synchronous>, transform_indices = @transform_7, window_bounds = array<i64: 16, 128>}, {transform_indices = @transform_8, window_bounds = array<i64: 8, 128>}]} {
    %c0 = arith.constant 0 : index
    %c0_0 = arith.constant 0 : index
    %0 = vector.load %arg1[%c0, %c0_0] : memref<8x16xf32, #tpu.memory_space<vmem>>, vector<8x16xf32>
    %1 = arith.truncf %0 : vector<8x16xf32> to vector<8x16xbf16>
    %c0_1 = arith.constant 0 : index
    %c0_2 = arith.constant 0 : index
    %2 = vector.load %arg2[%c0_1, %c0_2] : memref<16x128xbf16, #tpu.memory_space<vmem>>, vector<16x128xbf16>
    %cst = arith.constant dense<0.000000e+00> : vector<8x128xf32>
    %3 = tpu.matmul %1, %2, %cst {dimension_numbers = #tpu.dot_dimension_numbers<[1], [0], [0], [1], [0, 0, 1, 1], [], []>} : vector<8x16xbf16>, vector<16x128xbf16>, vector<8x128xf32> -> vector<8x128xf32>
    %c0_3 = arith.constant 0 : index
    %c0_4 = arith.constant 0 : index
    %4 = vector.load %arg3[%c0_3, %c0_4] : memref<1x128xf32, #tpu.memory_space<vmem>>, vector<1x128xf32>
    %5 = vector.broadcast %4 : vector<1x128xf32> to vector<8x128xf32>
    %6 = arith.addf %3, %5 : vector<8x128xf32>
    %cst_5 = arith.constant 0.000000e+00 : f32
    %7 = vector.broadcast %cst_5 : f32 to vector<8x128xf32>
    %8 = arith.maximumf %6, %7 : vector<8x128xf32>
    %9 = arith.truncf %8 : vector<8x128xf32> to vector<8x128xbf16>
    %c0_6 = arith.constant 0 : index
    %c0_7 = arith.constant 0 : index
    %10 = vector.load %arg4[%c0_6, %c0_7] : memref<128x128xbf16, #tpu.memory_space<vmem>>, vector<128x128xbf16>
    %cst_8 = arith.constant dense<0.000000e+00> : vector<8x128xf32>
    %11 = tpu.matmul %9, %10, %cst_8 {dimension_numbers = #tpu.dot_dimension_numbers<[1], [0], [0], [1], [0, 0, 1, 1], [], []>} : vector<8x128xbf16>, vector<128x128xbf16>, vector<8x128xf32> -> vector<8x128xf32>
    %c0_9 = arith.constant 0 : index
    %c0_10 = arith.constant 0 : index
    %12 = vector.load %arg5[%c0_9, %c0_10] : memref<1x128xf32, #tpu.memory_space<vmem>>, vector<1x128xf32>
    %13 = vector.broadcast %12 : vector<1x128xf32> to vector<8x128xf32>
    %14 = arith.addf %11, %13 : vector<8x128xf32>
    %cst_11 = arith.constant 0.000000e+00 : f32
    %15 = vector.broadcast %cst_11 : f32 to vector<8x128xf32>
    %16 = arith.maximumf %14, %15 : vector<8x128xf32>
    %17 = arith.truncf %16 : vector<8x128xf32> to vector<8x128xbf16>
    %c0_12 = arith.constant 0 : index
    %c0_13 = arith.constant 0 : index
    %18 = vector.load %arg6[%c0_12, %c0_13] : memref<128x128xbf16, #tpu.memory_space<vmem>>, vector<128x128xbf16>
    %cst_14 = arith.constant dense<0.000000e+00> : vector<8x128xf32>
    %19 = tpu.matmul %17, %18, %cst_14 {dimension_numbers = #tpu.dot_dimension_numbers<[1], [0], [0], [1], [0, 0, 1, 1], [], []>} : vector<8x128xbf16>, vector<128x128xbf16>, vector<8x128xf32> -> vector<8x128xf32>
    %c0_15 = arith.constant 0 : index
    %c0_16 = arith.constant 0 : index
    %20 = vector.load %arg8[%c0_15, %c0_16] : memref<16x128xbf16, #tpu.memory_space<vmem>>, vector<16x128xbf16>
    %cst_17 = arith.constant dense<0.000000e+00> : vector<8x128xf32>
    %21 = tpu.matmul %1, %20, %cst_17 {dimension_numbers = #tpu.dot_dimension_numbers<[1], [0], [0], [1], [0, 0, 1, 1], [], []>} : vector<8x16xbf16>, vector<16x128xbf16>, vector<8x128xf32> -> vector<8x128xf32>
    %22 = arith.addf %19, %21 : vector<8x128xf32>
    %c0_18 = arith.constant 0 : index
    %c0_19 = arith.constant 0 : index
    %23 = vector.load %arg7[%c0_18, %c0_19] : memref<1x128xf32, #tpu.memory_space<vmem>>, vector<1x128xf32>
    %24 = vector.broadcast %23 : vector<1x128xf32> to vector<8x128xf32>
    %25 = arith.addf %22, %24 : vector<8x128xf32>
    %c0_20 = arith.constant 0 : index
    %c0_21 = arith.constant 0 : index
    %26 = vector.load %arg9[%c0_20, %c0_21] : memref<8x128xf32, #tpu.memory_space<vmem>>, vector<8x128xf32>
    tpu.vector_store %arg9[%c0_20, %c0_21], %25 {strides = array<i32>} : memref<8x128xf32, #tpu.memory_space<vmem>>, vector<8x128xf32>,
    return
  }
  func.func @transform_0(%arg0: i32) -> (i32, i32) {
    %c0_i32 = arith.constant 0 : i32
    %c0_i32_0 = arith.constant 0 : i32
    return %arg0, %c0_i32 : i32, i32
  }
  func.func @transform_1(%arg0: i32) -> (i32, i32) {
    %c0_i32 = arith.constant 0 : i32
    %c0_i32_0 = arith.constant 0 : i32
    %c0_i32_1 = arith.constant 0 : i32
    return %c0_i32, %c0_i32_0 : i32, i32
  }
  func.func @transform_2(%arg0: i32) -> (i32, i32) {
    %c0_i32 = arith.constant 0 : i32
    %c0_i32_0 = arith.constant 0 : i32
    %c0_i32_1 = arith.constant 0 : i32
    return %c0_i32, %c0_i32_0 : i32, i32
  }
  func.func @transform_3(%arg0: i32) -> (i32, i32) {
    %c0_i32 = arith.constant 0 : i32
    %c0_i32_0 = arith.constant 0 : i32
    %c0_i32_1 = arith.constant 0 : i32
    return %c0_i32, %c0_i32_0 : i32, i32
  }
  func.func @transform_4(%arg0: i32) -> (i32, i32) {
    %c0_i32 = arith.constant 0 : i32
    %c0_i32_0 = arith.constant 0 : i32
    %c0_i32_1 = arith.constant 0 : i32
    return %c0_i32, %c0_i32_0 : i32, i32
  }
  func.func @transform_5(%arg0: i32) -> (i32, i32) {
    %c0_i32 = arith.constant 0 : i32
    %c0_i32_0 = arith.constant 0 : i32
    %c0_i32_1 = arith.constant 0 : i32
    return %c0_i32, %c0_i32_0 : i32, i32
  }
  func.func @transform_6(%arg0: i32) -> (i32, i32) {
    %c0_i32 = arith.constant 0 : i32
    %c0_i32_0 = arith.constant 0 : i32
    %c0_i32_1 = arith.constant 0 : i32
    return %c0_i32, %c0_i32_0 : i32, i32
  }
  func.func @transform_7(%arg0: i32) -> (i32, i32) {
    %c0_i32 = arith.constant 0 : i32
    %c0_i32_0 = arith.constant 0 : i32
    %c0_i32_1 = arith.constant 0 : i32
    return %c0_i32, %c0_i32_0 : i32, i32
  }
  func.func @transform_8(%arg0: i32) -> (i32, i32) {
    %c0_i32 = arith.constant 0 : i32
    %c0_i32_0 = arith.constant 0 : i32
    return %arg0, %c0_i32 : i32, i32
  }
}

</mosaic_0001>

<llo_original>
// kernel: tpu_custom_call.1
$region0: #{tpu_custom_call.1}
  #allocation0 [shape = 'u32[]', space=smem, size = 0x4, offset = 0x4, fixed_abs, tag = 'smem constant byte address 0x4 - core index']
  #allocation1 [shape = 'u32[144,128]{1,0:T(1,128)}', space=vmem, size = 0x12000, scoped, tag = 'internal scratch']
  %s0 = inlined_call_operand.vmem [shape: f32[24,16], index: 0, kind: input, shape index: {}]
  %s1 = inlined_call_operand.vmem [shape: bf16[16,128], index: 1, kind: input, shape index: {}]
  %s2 = inlined_call_operand.vmem [shape: f32[1,128], index: 2, kind: input, shape index: {}]
  %s3 = inlined_call_operand.hbm [shape: bf16[128,128], index: 3, kind: input, shape index: {}]
  %s4 = inlined_call_operand.vmem [shape: f32[1,128], index: 4, kind: input, shape index: {}]
  %s5 = inlined_call_operand.hbm [shape: bf16[128,128], index: 5, kind: input, shape index: {}]
  %s6 = inlined_call_operand.vmem [shape: f32[1,128], index: 6, kind: input, shape index: {}]
  %s7 = inlined_call_operand.vmem [shape: bf16[16,128], index: 7, kind: input, shape index: {}]
  %s8 = inlined_call_operand.hbm [shape: f32[24,128], index: 8, kind: output, shape index: {}]
  %s9 = sld [smem:[#allocation0]]
  $region73: #{tpu_custom_call.1} parent=0
    _
  %s11 = ssub.s32 1, %s9
  %s12 = scalar_select 0, %s11, %s9
  $region1: #{tpu_custom_call.1} parent=0
    #allocation2 [shape = 'u8[32768]{0}', space=vmem, size = 0x8000, scoped, tag = 'input window, operand 3, single buffered']
    #allocation3 [shape = 's32[2]{0}', space=sflag, size = 0x8, scoped, tag = 'scoped memory for tpu_custom_call.1']
    #allocation4 [shape = 's32[2]{0}', space=sflag, size = 0x8, scoped, tag = 'scoped memory for tpu_custom_call.1']
    #allocation5 [shape = 'u8[32768]{0}', space=vmem, size = 0x8000, scoped, tag = 'input window, operand 5, single buffered']
    #allocation6 [shape = 's32[1]{0}', space=sflag, size = 0x4, scoped, tag = 'scoped memory for tpu_custom_call.1']
    #allocation7 [shape = 'u8[8192]{0}', space=vmem, size = 0x2000, scoped, tag = 'output window, operand 0']
    %13 = vsyncpa [#allocation3], 0
    %14 = vsyncpa [#allocation6], 0
    %15 = vsyncpa [#allocation4], 0
    %s16 = scalar_lea.sflag [#allocation4], 1
    %17 = vsyncpa %s16, 0
    loop: start=0, step=1, limit=5
    $region2: #{tpu_custom_call.1} parent=1 // loop_pre_header
      _
    $region3: #{tpu_custom_call.1} parent=1 // loop_header
      %s19 = sphi 0, %s23
      %p20 = scmp.ge.s32.totalorder %s19, 5
      %s29 = sphi 0, %s31
      %s32 = sphi 0, %s29
      %s33 = sphi 0, %s32
      %s49 = sphi 0, %s33
      %s53 = sphi 0, %s53
      %s55 = sphi 0, %s53
      %s56 = sphi 0, %s55
      %s70 = sphi 0, %s56
      %s74 = sphi 0, %s74
      %s76 = sphi 0, %s74
      %s77 = sphi 0, %s76
      %s91 = sphi 0, %s77
      %s95 = sphi 0, %s95
      %s97 = sphi 0, %s95
      %s98 = sphi 0, %s97
      %s112 = sphi 0, %s98
      %s116 = sphi 0, %s116
      %s118 = sphi 0, %s116
      %s119 = sphi 0, %s118
      %s133 = sphi 0, %s119
      %s137 = sphi 0, %s137
      %s139 = sphi 0, %s137
      %s140 = sphi 0, %s139
      %s154 = sphi 0, %s140
      %s158 = sphi 0, %s158
      %s160 = sphi 0, %s158
      %s161 = sphi 0, %s160
      %s175 = sphi 0, %s161
      %s179 = sphi 0, %s179
      %s181 = sphi 0, %s179
      %s182 = sphi 0, %s181
      %s196 = sphi 0, %s182
      %s202 = sphi 0, %s204
      %s205 = sphi 0, %s202
      %s206 = sphi 0, %s205
      %s222 = sphi 0, %s206
    $region4: #{tpu_custom_call.1} parent=1 // loop_header_branch
      %22 = sbr.rel (%p20) target = $region8
    $region5: #{tpu_custom_call.1} parent=1 // loop_body
      %s24 = ssub.s32 %s19, 1
      %s25 = ssub.s32 %s19, 2
      %s26 = sadd.s32 %s19, 1
      %s27 = ssub.s32 %s19, %s26
      %p28 = scmp.eq.s32.totalorder %s27, 0
      %s30 = sadd.s32 %s29, 1
      %s31 = scalar_select %p28, %s29, %s30
      %p34 = pneg %p28
      %p35 = scmp.eq.s32.totalorder %s19, 2
      %p36 = por %p34, %p35
      %p37 = scmp.ne.s32.totalorder %s29, %s32
      %p38 = scmp.eq.s32.totalorder %s19, 0
      %p39 = por %p37, %p38
      %p40 = scmp.ne.s32.totalorder %s29, %s32
      %p41 = scmp.eq.s32.totalorder %s24, 2
      %p42 = por %p40, %p41
      %p43 = scmp.ne.s32.totalorder %s32, %s33
      %p44 = scmp.eq.s32.totalorder %s24, 0
      %p45 = por %p43, %p44
      %p46 = scmp.ne.s32.totalorder %s32, %s33
      %p47 = scmp.eq.s32.totalorder %s25, 2
      %p48 = por %p46, %p47
      %p50 = scmp.ne.s32.totalorder %s33, %s49
      %p51 = scmp.eq.s32.totalorder %s25, 0
      %p52 = por %p50, %p51
      %s54 = sadd.s32 %s53, 1
      %p57 = scmp.eq.s32.totalorder %s19, 2
      %p58 = scmp.ne.s32.totalorder %s53, %s55
      %p59 = scmp.eq.s32.totalorder %s19, 0
      %p60 = por %p58, %p59
      %p61 = scmp.ne.s32.totalorder %s53, %s55
      %p62 = scmp.eq.s32.totalorder %s24, 2
      %p63 = por %p61, %p62
      %p64 = scmp.ne.s32.totalorder %s55, %s56
      %p65 = scmp.eq.s32.totalorder %s24, 0
      %p66 = por %p64, %p65
      %p67 = scmp.ne.s32.totalorder %s55, %s56
      %p68 = scmp.eq.s32.totalorder %s25, 2
      %p69 = por %p67, %p68
      %p71 = scmp.ne.s32.totalorder %s56, %s70
      %p72 = scmp.eq.s32.totalorder %s25, 0
      %p73 = por %p71, %p72
      %s75 = sadd.s32 %s74, 1
      %p78 = scmp.eq.s32.totalorder %s19, 2
      %p79 = scmp.ne.s32.totalorder %s74, %s76
      %p80 = scmp.eq.s32.totalorder %s19, 0
      %p81 = por %p79, %p80
      %p82 = scmp.ne.s32.totalorder %s74, %s76
      %p83 = scmp.eq.s32.totalorder %s24, 2
      %p84 = por %p82, %p83
      %p85 = scmp.ne.s32.totalorder %s76, %s77
      %p86 = scmp.eq.s32.totalorder %s24, 0
      %p87 = por %p85, %p86
      %p88 = scmp.ne.s32.totalorder %s76, %s77
      %p89 = scmp.eq.s32.totalorder %s25, 2
      %p90 = por %p88, %p89
      %p92 = scmp.ne.s32.totalorder %s77, %s91
      %p93 = scmp.eq.s32.totalorder %s25, 0
      %p94 = por %p92, %p93
      %s96 = sadd.s32 %s95, 1
      %p99 = scmp.eq.s32.totalorder %s19, 2
      %p100 = scmp.ne.s32.totalorder %s95, %s97
      %p101 = scmp.eq.s32.totalorder %s19, 0
      %p102 = por %p100, %p101
      %p103 = scmp.ne.s32.totalorder %s95, %s97
      %p104 = scmp.eq.s32.totalorder %s24, 2
      %p105 = por %p103, %p104
      %p106 = scmp.ne.s32.totalorder %s97, %s98
      %p107 = scmp.eq.s32.totalorder %s24, 0
      %p108 = por %p106, %p107
      %p109 = scmp.ne.s32.totalorder %s97, %s98
      %p110 = scmp.eq.s32.totalorder %s25, 2
      %p111 = por %p109, %p110
      %p113 = scmp.ne.s32.totalorder %s98, %s112
      %p114 = scmp.eq.s32.totalorder %s25, 0
      %p115 = por %p113, %p114
      %s117 = sadd.s32 %s116, 1
      %p120 = scmp.eq.s32.totalorder %s19, 2
      %p121 = scmp.ne.s32.totalorder %s116, %s118
      %p122 = scmp.eq.s32.totalorder %s19, 0
      %p123 = por %p121, %p122
      %p124 = scmp.ne.s32.totalorder %s116, %s118
      %p125 = scmp.eq.s32.totalorder %s24, 2
      %p126 = por %p124, %p125
      %p127 = scmp.ne.s32.totalorder %s118, %s119
      %p128 = scmp.eq.s32.totalorder %s24, 0
      %p129 = por %p127, %p128
      %p130 = scmp.ne.s32.totalorder %s118, %s119
      %p131 = scmp.eq.s32.totalorder %s25, 2
      %p132 = por %p130, %p131
      %p134 = scmp.ne.s32.totalorder %s119, %s133
      %p135 = scmp.eq.s32.totalorder %s25, 0
      %p136 = por %p134, %p135
      %s138 = sadd.s32 %s137, 1
      %p141 = scmp.eq.s32.totalorder %s19, 2
      %p142 = scmp.ne.s32.totalorder %s137, %s139
      %p143 = scmp.eq.s32.totalorder %s19, 0
      %p144 = por %p142, %p143
      %p145 = scmp.ne.s32.totalorder %s137, %s139
      %p146 = scmp.eq.s32.totalorder %s24, 2
      %p147 = por %p145, %p146
      %p148 = scmp.ne.s32.totalorder %s139, %s140
      %p149 = scmp.eq.s32.totalorder %s24, 0
      %p150 = por %p148, %p149
      %p151 = scmp.ne.s32.totalorder %s139, %s140
      %p152 = scmp.eq.s32.totalorder %s25, 2
      %p153 = por %p151, %p152
      %p155 = scmp.ne.s32.totalorder %s140, %s154
      %p156 = scmp.eq.s32.totalorder %s25, 0
      %p157 = por %p155, %p156
      %s159 = sadd.s32 %s158, 1
      %p162 = scmp.eq.s32.totalorder %s19, 2
      %p163 = scmp.ne.s32.totalorder %s158, %s160
      %p164 = scmp.eq.s32.totalorder %s19, 0
      %p165 = por %p163, %p164
      %p166 = scmp.ne.s32.totalorder %s158, %s160
      %p167 = scmp.eq.s32.totalorder %s24, 2
      %p168 = por %p166, %p167
      %p169 = scmp.ne.s32.totalorder %s160, %s161
      %p170 = scmp.eq.s32.totalorder %s24, 0
      %p171 = por %p169, %p170
      %p172 = scmp.ne.s32.totalorder %s160, %s161
      %p173 = scmp.eq.s32.totalorder %s25, 2
      %p174 = por %p172, %p173
      %p176 = scmp.ne.s32.totalorder %s161, %s175
      %p177 = scmp.eq.s32.totalorder %s25, 0
      %p178 = por %p176, %p177
      %s180 = sadd.s32 %s179, 1
      %p183 = scmp.eq.s32.totalorder %s19, 2
      %p184 = scmp.ne.s32.totalorder %s179, %s181
      %p185 = scmp.eq.s32.totalorder %s19, 0
      %p186 = por %p184, %p185
      %p187 = scmp.ne.s32.totalorder %s179, %s181
      %p188 = scmp.eq.s32.totalorder %s24, 2
      %p189 = por %p187, %p188
      %p190 = scmp.ne.s32.totalorder %s181, %s182
      %p191 = scmp.eq.s32.totalorder %s24, 0
      %p192 = por %p190, %p191
      %p193 = scmp.ne.s32.totalorder %s181, %s182
      %p194 = scmp.eq.s32.totalorder %s25, 2
      %p195 = por %p193, %p194
      %p197 = scmp.ne.s32.totalorder %s182, %s196
      %p198 = scmp.eq.s32.totalorder %s25, 0
      %p199 = por %p197, %p198
      %s200 = ssub.s32 %s19, %s26
      %p201 = scmp.eq.s32.totalorder %s200, 0
      %s203 = sadd.s32 %s202, 1
      %s204 = scalar_select %p201, %s202, %s203
      %p207 = pneg %p201
      %p208 = scmp.eq.s32.totalorder %s19, 2
      %p209 = por %p207, %p208
      %p210 = scmp.ne.s32.totalorder %s202, %s205
      %p211 = scmp.eq.s32.totalorder %s19, 0
      %p212 = por %p210, %p211
      %p213 = scmp.ne.s32.totalorder %s202, %s205
      %p214 = scmp.eq.s32.totalorder %s24, 2
      %p215 = por %p213, %p214
      %p216 = scmp.ne.s32.totalorder %s205, %s206
      %p217 = scmp.eq.s32.totalorder %s24, 0
      %p218 = por %p216, %p217
      %p219 = scmp.ne.s32.totalorder %s205, %s206
      %p220 = scmp.eq.s32.totalorder %s25, 2
      %p221 = por %p219, %p220
      %p223 = scmp.ne.s32.totalorder %s206, %s222
      %p224 = scmp.eq.s32.totalorder %s25, 0
      %p225 = por %p223, %p224
      %p226 = scmp.le.s32.totalorder 1, %s19
      %p227 = scmp.lt.s32.totalorder %s19, 4
      %p228 = pnand %p226, %p227
      %p229 = pneg %p228
      // Predicated region
      $region9: #{tpu_custom_call.1} parent=5 // pred_check
        _
      $region10: #{tpu_custom_call.1} parent=5 // pred_check_branch
        %231 = sbr.rel (%p228) target = $region12
      $region11: #{tpu_custom_call.1} parent=5 // pred_region
        %s232 = ssub.s32 %s19, 1
        // Predicated region
        $region13: #{tpu_custom_call.1} parent=11 // pred_check
          %p233 = pneg %p66
        $region14: #{tpu_custom_call.1} parent=11 // pred_check_branch
          %235 = sbr.rel (%p233) target = $region16
        $region15: #{tpu_custom_call.1} parent=11 // pred_region
          _
        $region16: #{tpu_custom_call.1} parent=11 // pred_fallthru
          _
        // Predicated region
        $region17: #{tpu_custom_call.1} parent=11 // pred_check
          %p236 = pneg %p87
        $region18: #{tpu_custom_call.1} parent=11 // pred_check_branch
          %238 = sbr.rel (%p236) target = $region20
        $region19: #{tpu_custom_call.1} parent=11 // pred_region
          _
        $region20: #{tpu_custom_call.1} parent=11 // pred_fallthru
          _
        // Predicated region
        $region21: #{tpu_custom_call.1} parent=11 // pred_check
          %p239 = pneg %p108
        $region22: #{tpu_custom_call.1} parent=11 // pred_check_branch
          %241 = sbr.rel (%p239) target = $region24
        $region23: #{tpu_custom_call.1} parent=11 // pred_region
          %s243 = ssub.s32 1024, 1024
          %244 = vsyncadd [#allocation3], %s243
          %s245 = sshll.u32 [#allocation2], 4
          %s246 = int_to_ptr.vmem [resolvable:$true] %s245
          %251 = dma.hbm_to_vmem [thread:$0]  %s3, 1024, %s246, [#allocation3], 64, 64, 4
        $region24: #{tpu_custom_call.1} parent=11 // pred_fallthru
          _
        // Predicated region
        $region25: #{tpu_custom_call.1} parent=11 // pred_check
          %p252 = pneg %p129
        $region26: #{tpu_custom_call.1} parent=11 // pred_check_branch
          %254 = sbr.rel (%p252) target = $region28
        $region27: #{tpu_custom_call.1} parent=11 // pred_region
          _
        $region28: #{tpu_custom_call.1} parent=11 // pred_fallthru
          _
        // Predicated region
        $region29: #{tpu_custom_call.1} parent=11 // pred_check
          %p255 = pneg %p150
        $region30: #{tpu_custom_call.1} parent=11 // pred_check_branch
          %257 = sbr.rel (%p255) target = $region32
        $region31: #{tpu_custom_call.1} parent=11 // pred_region
          %s259 = ssub.s32 1024, 1024
          %260 = vsyncadd [#allocation6], %s259
          %s261 = sshll.u32 [#allocation5], 4
          %s262 = int_to_ptr.vmem [resolvable:$true] %s261
          %267 = dma.hbm_to_vmem [thread:$0]  %s5, 1024, %s262, [#allocation6], 64, 64, 4
        $region32: #{tpu_custom_call.1} parent=11 // pred_fallthru
          _
        // Predicated region
        $region33: #{tpu_custom_call.1} parent=11 // pred_check
          %p268 = pneg %p171
        $region34: #{tpu_custom_call.1} parent=11 // pred_check_branch
          %270 = sbr.rel (%p268) target = $region36
        $region35: #{tpu_custom_call.1} parent=11 // pred_region
          _
        $region36: #{tpu_custom_call.1} parent=11 // pred_fallthru
          _
        // Predicated region
        $region37: #{tpu_custom_call.1} parent=11 // pred_check
          %p271 = pneg %p192
        $region38: #{tpu_custom_call.1} parent=11 // pred_check_branch
          %273 = sbr.rel (%p271) target = $region40
        $region39: #{tpu_custom_call.1} parent=11 // pred_region
          _
        $region40: #{tpu_custom_call.1} parent=11 // pred_fallthru
          _
      $region12: #{tpu_custom_call.1} parent=5 // pred_fallthru
        _
      %p274 = scmp.lt.s32.totalorder %s19, 3
      // Predicated region
      $region41: #{tpu_custom_call.1} parent=5 // pred_check
        %p275 = pneg %p274
      $region42: #{tpu_custom_call.1} parent=5 // pred_check_branch
        %277 = sbr.rel (%p275) target = $region44
      $region43: #{tpu_custom_call.1} parent=5 // pred_region
        // Predicated region
        $region45: #{tpu_custom_call.1} parent=43 // pred_check
          %p278 = pneg %p39
        $region46: #{tpu_custom_call.1} parent=43 // pred_check_branch
          %280 = sbr.rel (%p278) target = $region48
        $region47: #{tpu_custom_call.1} parent=43 // pred_region
          %p281 = scmp.lt.s32.totalorder %s19, 2
          %s282 = scalar_select %p281, %s19, 2
          %s283 = smul.addr %s282, 8
          %s284 = scalar_lea.vmem %s0, %s283
        $region48: #{tpu_custom_call.1} parent=43 // pred_fallthru
          _
      $region44: #{tpu_custom_call.1} parent=5 // pred_fallthru
        _
      %p285 = scmp.le.s32.totalorder 1, %s19
      %p286 = scmp.lt.s32.totalorder %s19, 4
      %p287 = pnand %p285, %p286
      %p288 = pneg %p287
      // Predicated region
      $region49: #{tpu_custom_call.1} parent=5 // pred_check
        _
      $region50: #{tpu_custom_call.1} parent=5 // pred_check_branch
        %290 = sbr.rel (%p287) target = $region52
      $region51: #{tpu_custom_call.1} parent=5 // pred_region
        %s291 = ssub.s32 %s19, 1
        // Predicated region
        $region53: #{tpu_custom_call.1} parent=51 // pred_check
          %p292 = pneg %p108
        $region54: #{tpu_custom_call.1} parent=51 // pred_check_branch
          %294 = sbr.rel (%p292) target = $region56
        $region55: #{tpu_custom_call.1} parent=51 // pred_region
          %295 = dma.done [#allocation3], 1024
        $region56: #{tpu_custom_call.1} parent=51 // pred_fallthru
          _
        // Predicated region
        $region57: #{tpu_custom_call.1} parent=51 // pred_check
          %p296 = pneg %p150
        $region58: #{tpu_custom_call.1} parent=51 // pred_check_branch
          %298 = sbr.rel (%p296) target = $region60
        $region59: #{tpu_custom_call.1} parent=51 // pred_region
          %299 = dma.done [#allocation6], 1024
        $region60: #{tpu_custom_call.1} parent=51 // pred_fallthru
          _
        %p300 = scmp.lt.s32.totalorder %s24, 2
        %s301 = scalar_select %p300, %s24, 2
        %s302 = smul.addr %s301, 8
        %s303 = scalar_lea.vmem %s0, %s302
        %p304 = pneg %p45
        %p305 = pneg %p42
        %p306 = pneg %p66
        %p307 = pneg %p63
        %p308 = pneg %p87
        %p309 = pneg %p84
        %p310 = pneg %p108
        %p311 = pneg %p105
        %p312 = pneg %p129
        %p313 = pneg %p126
        %p314 = pneg %p150
        %p315 = pneg %p147
        %p316 = pneg %p171
        %p317 = pneg %p168
        %p318 = pneg %p192
        %p319 = pneg %p189
        %p320 = pneg %p218
        %p321 = pneg %p215
        %s322 = sand.u32 %s205, 1
        %s323 = scalar_lea.sflag [#allocation4], %s322
        %s324 = sand.u32 %s205, 1
        %s325 = smul.addr %s324, 8
        %s326 = scalar_lea.vmem [#allocation7], %s325
        %p327 = scmp.lt.s32.totalorder %s24, 2
        %s328 = scalar_select %p327, %s24, 2
        %s329 = smul.addr %s328, 8
        %s330 = scalar_lea.vmem %s0, %s329
        %v332 = vld [vmem:[%s330] sm:$0xff]
        %v333 = vpack.c.bf16 %v332, %v332
        %v334 = vld [vmem:[%s1] sm:$0xf]
        %v335 = vld [vmem:[%s1 + $0x4] sm:$0xf]
        %v336 = vld [vmem:[%s2] sm:$0x1]
        %v338 = vlaneseq
        %v339 = vshrl.u32 %v338, 7
        %v340 = vsub.s32 0, %v339
        %v341 = vrot.slane %v336, %v340
        %v345 = vunpack.c.l.b16 %v334
        %v346 = vunpack.c.l.b16 %v335
        %v347 = vpack.c.b16 %v346, %v345
        %vm349 = vcmask 130048
        %v351 = vsel %vm349, %v333, 0
        %353 = vmatprep.subr.bf16.mxu0 0
        %354 = vmatpush1.bf16.msra.mxu0 %v347
        %355 = vmatprep.subr.bf16.mxu0 0
        %356 = vmatpush1.bf16.msra.mxu0 0
        %357 = vmatprep.subr.bf16.mxu0 0
        %358 = vmatpush1.bf16.msra.mxu0 0
        %359 = vmatprep.subr.bf16.mxu0 0
        %360 = vmatpush1.bf16.msra.mxu0 0
        %361 = vmatprep.subr.bf16.mxu0 0
        %362 = vmatpush1.bf16.msra.mxu0 0
        %363 = vmatprep.subr.bf16.mxu0 0
        %364 = vmatpush1.bf16.msra.mxu0 0
        %365 = vmatprep.subr.bf16.mxu0 0
        %366 = vmatpush1.bf16.msra.mxu0 0
        %367 = vmatprep.subr.bf16.mxu0 0
        %368 = vmatpush1.bf16.msra.mxu0 0
        %369 = vmatprep.subr.bf16.mxu0 0
        %370 = vmatpush1.bf16.msra.mxu0 0
        %371 = vmatprep.subr.bf16.mxu0 0
        %372 = vmatpush1.bf16.msra.mxu0 0
        %373 = vmatprep.subr.bf16.mxu0 0
        %374 = vmatpush1.bf16.msra.mxu0 0
        %375 = vmatprep.subr.bf16.mxu0 0
        %376 = vmatpush1.bf16.msra.mxu0 0
        %377 = vmatprep.subr.bf16.mxu0 0
        %378 = vmatpush1.bf16.msra.mxu0 0
        %379 = vmatprep.subr.bf16.mxu0 0
        %380 = vmatpush1.bf16.msra.mxu0 0
        %381 = vmatprep.subr.bf16.mxu0 0
        %382 = vmatpush1.bf16.msra.mxu0 0
        %383 = vmatprep.subr.bf16.mxu0 0
        %384 = vmatpush1.bf16.msra.mxu0 0
        %385 = vmatprep.mubr.bf16.mxu0 0
        %386 = vmatmul.mubr.bf16.gmra.mrb[0].mxu0 %v351
        %v387 = vpop.f32.mrb[0].mxu0
        %v388 = vadd.f32 %v341, %v387
        %v389 = vpop.f32.mrb[0].mxu0
        %v390 = vpop.f32.mrb[0].mxu0
        %v391 = vpop.f32.mrb[0].mxu0
        %392 = vdwg.mxu0
        %v393 = vmax.f32 %v388, 0.0
        %v394 = vpack.c.bf16 %v393, %v393
        %v395 = vld [vmem:[#allocation2] sm:$0xf]
        %v396 = vld [vmem:[#allocation2 + $0x4] sm:$0xf]
        %v397 = vld [vmem:[#allocation2 + $0x8] sm:$0xf]
        %v398 = vld [vmem:[#allocation2 + $0xc] sm:$0xf]
        %v399 = vld [vmem:[#allocation2 + $0x10] sm:$0xf]
        %v400 = vld [vmem:[#allocation2 + $0x14] sm:$0xf]
        %v401 = vld [vmem:[#allocation2 + $0x18] sm:$0xf]
        %v402 = vld [vmem:[#allocation2 + $0x1c] sm:$0xf]
        %v403 = vld [vmem:[#allocation2 + $0x20] sm:$0xf]
        %v404 = vld [vmem:[#allocation2 + $0x24] sm:$0xf]
        %v405 = vld [vmem:[#allocation2 + $0x28] sm:$0xf]
        %v406 = vld [vmem:[#allocation2 + $0x2c] sm:$0xf]
        %v407 = vld [vmem:[#allocation2 + $0x30] sm:$0xf]
        %v408 = vld [vmem:[#allocation2 + $0x34] sm:$0xf]
        %v409 = vld [vmem:[#allocation2 + $0x38] sm:$0xf]
        %v410 = vld [vmem:[#allocation2 + $0x3c] sm:$0xf]
        %v411 = vld [vmem:[%s4] sm:$0x1]
        %v413 = vlaneseq
        %v414 = vshrl.u32 %v413, 7
        %v415 = vsub.s32 0, %v414
        %v416 = vrot.slane %v411, %v415
        %v434 = vunpack.c.l.b16 %v395
        %v435 = vunpack.c.l.b16 %v396
        %v436 = vunpack.c.l.b16 %v397
        %v437 = vunpack.c.l.b16 %v398
        %v438 = vunpack.c.l.b16 %v399
        %v439 = vunpack.c.l.b16 %v400
        %v440 = vunpack.c.l.b16 %v401
        %v441 = vunpack.c.l.b16 %v402
        %v442 = vunpack.c.l.b16 %v403
        %v443 = vunpack.c.l.b16 %v404
        %v444 = vunpack.c.l.b16 %v405
        %v445 = vunpack.c.l.b16 %v406
        %v446 = vunpack.c.l.b16 %v407
        %v447 = vunpack.c.l.b16 %v408
        %v448 = vunpack.c.l.b16 %v409
        %v449 = vunpack.c.l.b16 %v410
        %v450 = vpack.c.b16 %v435, %v434
        %v451 = vpack.c.b16 %v437, %v436
        %v452 = vpack.c.b16 %v439, %v438
        %v453 = vpack.c.b16 %v441, %v440
        %v454 = vpack.c.b16 %v443, %v442
        %v455 = vpack.c.b16 %v445, %v444
        %v456 = vpack.c.b16 %v447, %v446
        %v457 = vpack.c.b16 %v449, %v448
        %466 = vmatprep.subr.bf16.mxu0 0
        %467 = vmatpush1.bf16.msra.mxu0 %v450
        %468 = vmatprep.subr.bf16.mxu0 0
        %469 = vmatpush1.bf16.msra.mxu0 %v451
        %470 = vmatprep.subr.bf16.mxu0 0
        %471 = vmatpush1.bf16.msra.mxu0 %v452
        %472 = vmatprep.subr.bf16.mxu0 0
        %473 = vmatpush1.bf16.msra.mxu0 %v453
        %474 = vmatprep.subr.bf16.mxu0 0
        %475 = vmatpush1.bf16.msra.mxu0 %v454
        %476 = vmatprep.subr.bf16.mxu0 0
        %477 = vmatpush1.bf16.msra.mxu0 %v455
        %478 = vmatprep.subr.bf16.mxu0 0
        %479 = vmatpush1.bf16.msra.mxu0 %v456
        %480 = vmatprep.subr.bf16.mxu0 0
        %481 = vmatpush1.bf16.msra.mxu0 %v457
        %482 = vmatprep.subr.bf16.mxu0 0
        %483 = vmatpush1.bf16.msra.mxu0 0
        %484 = vmatprep.subr.bf16.mxu0 0
        %485 = vmatpush1.bf16.msra.mxu0 0
        %486 = vmatprep.subr.bf16.mxu0 0
        %487 = vmatpush1.bf16.msra.mxu0 0
        %488 = vmatprep.subr.bf16.mxu0 0
        %489 = vmatpush1.bf16.msra.mxu0 0
        %490 = vmatprep.subr.bf16.mxu0 0
        %491 = vmatpush1.bf16.msra.mxu0 0
        %492 = vmatprep.subr.bf16.mxu0 0
        %493 = vmatpush1.bf16.msra.mxu0 0
        %494 = vmatprep.subr.bf16.mxu0 0
        %495 = vmatpush1.bf16.msra.mxu0 0
        %496 = vmatprep.subr.bf16.mxu0 0
        %497 = vmatpush1.bf16.msra.mxu0 0
        %498 = vmatprep.mubr.bf16.mxu0 0
        %499 = vmatmul.mubr.bf16.gmra.mrb[0].mxu0 %v394
        %v500 = vpop.f32.mrb[0].mxu0
        %v501 = vadd.f32 %v416, %v500
        %v502 = vpop.f32.mrb[0].mxu0
        %v503 = vpop.f32.mrb[0].mxu0
        %v504 = vpop.f32.mrb[0].mxu0
        %505 = vdwg.mxu0
        %v506 = vmax.f32 %v501, 0.0
        %v507 = vpack.c.bf16 %v506, %v506
        %v508 = vld [vmem:[#allocation5] sm:$0xf]
        %v509 = vld [vmem:[#allocation5 + $0x4] sm:$0xf]
        %v510 = vld [vmem:[#allocation5 + $0x8] sm:$0xf]
        %v511 = vld [vmem:[#allocation5 + $0xc] sm:$0xf]
        %v512 = vld [vmem:[#allocation5 + $0x10] sm:$0xf]
        %v513 = vld [vmem:[#allocation5 + $0x14] sm:$0xf]
        %v514 = vld [vmem:[#allocation5 + $0x18] sm:$0xf]
        %v515 = vld [vmem:[#allocation5 + $0x1c] sm:$0xf]
        %v516 = vld [vmem:[#allocation5 + $0x20] sm:$0xf]
        %v517 = vld [vmem:[#allocation5 + $0x24] sm:$0xf]
        %v518 = vld [vmem:[#allocation5 + $0x28] sm:$0xf]
        %v519 = vld [vmem:[#allocation5 + $0x2c] sm:$0xf]
        %v520 = vld [vmem:[#allocation5 + $0x30] sm:$0xf]
        %v521 = vld [vmem:[#allocation5 + $0x34] sm:$0xf]
        %v522 = vld [vmem:[#allocation5 + $0x38] sm:$0xf]
        %v523 = vld [vmem:[#allocation5 + $0x3c] sm:$0xf]
        %v524 = vld [vmem:[%s7] sm:$0xf]
        %v525 = vld [vmem:[%s7 + $0x4] sm:$0xf]
        %v528 = vunpack.c.l.b16 %v524
        %v529 = vunpack.c.l.b16 %v525
        %v530 = vpack.c.b16 %v529, %v528
        %532 = vmatprep.subr.bf16.mxu0 0
        %533 = vmatpush1.bf16.msra.mxu0 %v530
        %534 = vmatprep.subr.bf16.mxu0 0
        %535 = vmatpush1.bf16.msra.mxu0 0
        %536 = vmatprep.subr.bf16.mxu0 0
        %537 = vmatpush1.bf16.msra.mxu0 0
        %538 = vmatprep.subr.bf16.mxu0 0
        %539 = vmatpush1.bf16.msra.mxu0 0
        %540 = vmatprep.subr.bf16.mxu0 0
        %541 = vmatpush1.bf16.msra.mxu0 0
        %542 = vmatprep.subr.bf16.mxu0 0
        %543 = vmatpush1.bf16.msra.mxu0 0
        %544 = vmatprep.subr.bf16.mxu0 0
        %545 = vmatpush1.bf16.msra.mxu0 0
        %546 = vmatprep.subr.bf16.mxu0 0
        %547 = vmatpush1.bf16.msra.mxu0 0
        %548 = vmatprep.subr.bf16.mxu0 0
        %549 = vmatpush1.bf16.msra.mxu0 0
        %550 = vmatprep.subr.bf16.mxu0 0
        %551 = vmatpush1.bf16.msra.mxu0 0
        %552 = vmatprep.subr.bf16.mxu0 0
        %553 = vmatpush1.bf16.msra.mxu0 0
        %554 = vmatprep.subr.bf16.mxu0 0
        %555 = vmatpush1.bf16.msra.mxu0 0
        %556 = vmatprep.subr.bf16.mxu0 0
        %557 = vmatpush1.bf16.msra.mxu0 0
        %558 = vmatprep.subr.bf16.mxu0 0
        %559 = vmatpush1.bf16.msra.mxu0 0
        %560 = vmatprep.subr.bf16.mxu0 0
        %561 = vmatpush1.bf16.msra.mxu0 0
        %562 = vmatprep.subr.bf16.mxu0 0
        %563 = vmatpush1.bf16.msra.mxu0 0
        %564 = vmatprep.mubr.bf16.mxu0 0
        %565 = vmatmul.mubr.bf16.gmra.mrb[0].mxu0 %v351
        %v566 = vpop.f32.mrb[0].mxu0
        %v567 = vadd.f32 0.0, %v566
        %v568 = vpop.f32.mrb[0].mxu0
        %v569 = vpop.f32.mrb[0].mxu0
        %v570 = vpop.f32.mrb[0].mxu0
        %571 = vdwg.mxu0
        %v588 = vunpack.c.l.b16 %v508
        %v589 = vunpack.c.l.b16 %v509
        %v590 = vunpack.c.l.b16 %v510
        %v591 = vunpack.c.l.b16 %v511
        %v592 = vunpack.c.l.b16 %v512
        %v593 = vunpack.c.l.b16 %v513
        %v594 = vunpack.c.l.b16 %v514
        %v595 = vunpack.c.l.b16 %v515
        %v596 = vunpack.c.l.b16 %v516
        %v597 = vunpack.c.l.b16 %v517
        %v598 = vunpack.c.l.b16 %v518
        %v599 = vunpack.c.l.b16 %v519
        %v600 = vunpack.c.l.b16 %v520
        %v601 = vunpack.c.l.b16 %v521
        %v602 = vunpack.c.l.b16 %v522
        %v603 = vunpack.c.l.b16 %v523
        %v604 = vpack.c.b16 %v589, %v588
        %v605 = vpack.c.b16 %v591, %v590
        %v606 = vpack.c.b16 %v593, %v592
        %v607 = vpack.c.b16 %v595, %v594
        %v608 = vpack.c.b16 %v597, %v596
        %v609 = vpack.c.b16 %v599, %v598
        %v610 = vpack.c.b16 %v601, %v600
        %v611 = vpack.c.b16 %v603, %v602
        %620 = vmatprep.subr.bf16.mxu0 0
        %621 = vmatpush1.bf16.msra.mxu0 %v604
        %622 = vmatprep.subr.bf16.mxu0 0
        %623 = vmatpush1.bf16.msra.mxu0 %v605
        %624 = vmatprep.subr.bf16.mxu0 0
        %625 = vmatpush1.bf16.msra.mxu0 %v606
        %626 = vmatprep.subr.bf16.mxu0 0
        %627 = vmatpush1.bf16.msra.mxu0 %v607
        %628 = vmatprep.subr.bf16.mxu0 0
        %629 = vmatpush1.bf16.msra.mxu0 %v608
        %630 = vmatprep.subr.bf16.mxu0 0
        %631 = vmatpush1.bf16.msra.mxu0 %v609
        %632 = vmatprep.subr.bf16.mxu0 0
        %633 = vmatpush1.bf16.msra.mxu0 %v610
        %634 = vmatprep.subr.bf16.mxu0 0
        %635 = vmatpush1.bf16.msra.mxu0 %v611
        %636 = vmatprep.subr.bf16.mxu0 0
        %637 = vmatpush1.bf16.msra.mxu0 0
        %638 = vmatprep.subr.bf16.mxu0 0
        %639 = vmatpush1.bf16.msra.mxu0 0
        %640 = vmatprep.subr.bf16.mxu0 0
        %641 = vmatpush1.bf16.msra.mxu0 0
        %642 = vmatprep.subr.bf16.mxu0 0
        %643 = vmatpush1.bf16.msra.mxu0 0
        %644 = vmatprep.subr.bf16.mxu0 0
        %645 = vmatpush1.bf16.msra.mxu0 0
        %646 = vmatprep.subr.bf16.mxu0 0
        %647 = vmatpush1.bf16.msra.mxu0 0
        %648 = vmatprep.subr.bf16.mxu0 0
        %649 = vmatpush1.bf16.msra.mxu0 0
        %650 = vmatprep.subr.bf16.mxu0 0
        %651 = vmatpush1.bf16.msra.mxu0 0
        %652 = vmatprep.mubr.bf16.mxu0 0
        %653 = vmatmul.mubr.bf16.gmra.mrb[0].mxu0 %v507
        %v654 = vpop.f32.mrb[0].mxu0
        %v655 = vadd.f32 %v567, %v654
        %v656 = vpop.f32.mrb[0].mxu0
        %v657 = vpop.f32.mrb[0].mxu0
        %v658 = vpop.f32.mrb[0].mxu0
        %659 = vdwg.mxu0
        %v660 = vld [vmem:[%s6] sm:$0x1]
        %v662 = vlaneseq
        %v663 = vshrl.u32 %v662, 7
        %v664 = vsub.s32 0, %v663
        %v665 = vrot.slane %v660, %v664
        %v667 = vadd.f32 %v655, %v665
        %668 = vst [vmem:[%s326] sm:$0xff] %v667
        %s669 = sand.u32 %s205, 1
        %s670 = scalar_lea.sflag [#allocation4], %s669
        %s671 = sand.u32 %s205, 1
        %s672 = smul.addr %s671, 8
        %s673 = scalar_lea.vmem [#allocation7], %s672
        // Predicated region
        $region61: #{tpu_custom_call.1} parent=51 // pred_check
          %p674 = pneg %p215
        $region62: #{tpu_custom_call.1} parent=51 // pred_check_branch
          %676 = sbr.rel (%p674) target = $region64
        $region63: #{tpu_custom_call.1} parent=51 // pred_region
          %s678 = ssub.s32 128, 128
          %679 = vsyncadd %s670, %s678
          %s680 = smul.addr %s24, 128
          %s681 = scalar_lea.hbm %s8, %s680
          %s683 = sshll.u32 %s673, 4
          %s684 = int_to_ptr.vmem [resolvable:$true] %s683
          %686 = dma.vmem_to_hbm [thread:$0]  %s684, 128, %s681, %s670
        $region64: #{tpu_custom_call.1} parent=51 // pred_fallthru
          _
      $region52: #{tpu_custom_call.1} parent=5 // pred_fallthru
        _
      %p687 = scmp.le.s32.totalorder 2, %s19
      // Predicated region
      $region65: #{tpu_custom_call.1} parent=5 // pred_check
        %p688 = pneg %p687
      $region66: #{tpu_custom_call.1} parent=5 // pred_check_branch
        %690 = sbr.rel (%p688) target = $region68
      $region67: #{tpu_custom_call.1} parent=5 // pred_region
        %s691 = ssub.s32 %s19, 2
        // Predicated region
        $region69: #{tpu_custom_call.1} parent=67 // pred_check
          %p692 = pneg %p221
        $region70: #{tpu_custom_call.1} parent=67 // pred_check_branch
          %694 = sbr.rel (%p692) target = $region72
        $region71: #{tpu_custom_call.1} parent=67 // pred_region
          %s695 = sand.u32 %s206, 1
          %s696 = scalar_lea.sflag [#allocation4], %s695
          %s697 = sand.u32 %s206, 1
          %s698 = smul.addr %s697, 8
          %s699 = scalar_lea.vmem [#allocation7], %s698
          %700 = dma.done %s696, 128
        $region72: #{tpu_custom_call.1} parent=67 // pred_fallthru
          _
      $region68: #{tpu_custom_call.1} parent=5 // pred_fallthru
        _
    $region6: #{tpu_custom_call.1} parent=1 // loop_footer
      %s23 = sadd.s32 1, %s19
    $region7: #{tpu_custom_call.1} parent=1 // loop_footer_branch
      %18 = sbr.rel target = $region3
    $region8: #{tpu_custom_call.1} parent=1 // loop_exit
      _
    %701 = vsyncpa [#allocation3], 1
    %s702 = scalar_lea.sflag [#allocation3], 1
    %703 = vsyncpa %s702, 1
    %704 = vsyncpa [#allocation6], 1
    %705 = vsyncpa [#allocation4], 1
    %s706 = scalar_lea.sflag [#allocation4], 1
    %707 = vsyncpa %s706, 1

</llo_original>
